<compile_context>
chip_gen: v6e
topology: v6e:2x2x1
jax: 0.10.0
libtpu: 0.0.40
codegen_flags: <defaults>
</compile_context>

<pallas_src>
import functools

import jax
import jax.numpy as jnp
from jax import lax
from jax.experimental import pallas as pl
from jax.experimental.pallas import tpu as pltpu


def _sample_kernel(verts_ref, vol_ref, sel_ref, out_ref, acc_ref,
                   *, D, H, W, C, TILE_DH):
    """Grid = (B, N tiles, DH tiles); DH is the reduction (last, 'arbitrary').

    verts_ref: [1, 3, TILE_N]   (x, y, z) in [-1, 1]
    vol_ref:   [1, W*C, TILE_DH] volume slab, layout vol[w*C + c, z*H + y]
    sel_ref:   [C, W*C]          sel[c, w*C + c] == 1 (fold W groups back to C)
    out_ref:   [1, C, TILE_N]
    acc_ref:   [W*C, TILE_N] f32 accumulator (scratch)
    """
    k = pl.program_id(2)

    @pl.when(k == 0)
    def _init():
        acc_ref[...] = jnp.zeros_like(acc_ref)

    tile_n = verts_ref.shape[2]
    tile_dh = vol_ref.shape[2]
    wc = vol_ref.shape[1]

    v = verts_ref[0]                      # [3, TILE_N], lane-dense
    gy = v[1:2, :]
    gz = v[2:3, :]

    # Unnormalize (align_corners=True) + clamp (padding_mode='border').
    fy = jnp.clip((gy + 1.0) * 0.5 * (H - 1), 0.0, float(H - 1))
    fz = jnp.clip((gz + 1.0) * 0.5 * (D - 1), 0.0, float(D - 1))
    y0f = jnp.floor(fy)
    z0f = jnp.floor(fz)
    wy1 = fy - y0f
    wy0 = 1.0 - wy1
    wz1 = fz - z0f
    wz0 = 1.0 - wz1
    y0 = y0f.astype(jnp.int32)
    y1 = jnp.minimum(y0 + 1, H - 1)
    z0 = z0f.astype(jnp.int32)
    z1 = jnp.minimum(z0 + 1, D - 1)

    # Four (z, y) corner linear indices into D*H, each [1, TILE_N].
    i00 = z0 * H + y0
    i01 = z0 * H + y1
    i10 = z1 * H + y0
    i11 = z1 * H + y1
    w00 = wz0 * wy0
    w01 = wz0 * wy1
    w10 = wz1 * wy0
    w11 = wz1 * wy1

    # Transposed weighted one-hot for this DH tile: [TILE_DH, TILE_N].
    # Additive form double-counts clamped border corners correctly.
    dh_iota = lax.broadcasted_iota(jnp.int32, (tile_dh, tile_n), 0) + k * TILE_DH
    oh = jnp.where(dh_iota == i00, w00, 0.0)
    oh = oh + jnp.where(dh_iota == i01, w01, 0.0)
    oh = oh + jnp.where(dh_iota == i10, w10, 0.0)
    oh = oh + jnp.where(dh_iota == i11, w11, 0.0)

    vol = vol_ref[0]                      # [W*C, TILE_DH], native dtype
    acc_ref[...] += jnp.dot(vol, oh.astype(vol.dtype),
                            preferred_element_type=jnp.float32)

    @pl.when(k == pl.num_programs(2) - 1)
    def _finalize():
        # x-interpolation: fold the W groups of the accumulator with wx0/wx1.
        gx = v[0:1, :]
        fx = jnp.clip((gx + 1.0) * 0.5 * (W - 1), 0.0, float(W - 1))
        x0f = jnp.floor(fx)
        wx1 = fx - x0f
        wx0 = 1.0 - wx1
        x0 = x0f.astype(jnp.int32)
        x1 = jnp.minimum(x0 + 1, W - 1)

        j_iota = lax.broadcasted_iota(jnp.int32, (wc, tile_n), 0)
        x0c = x0 * C
        x1c = x1 * C
        wxf = jnp.where((j_iota >= x0c) & (j_iota < x0c + C), wx0, 0.0)
        wxf = wxf + jnp.where((j_iota >= x1c) & (j_iota < x1c + C), wx1, 0.0)

        m = acc_ref[...] * wxf            # [W*C, TILE_N] f32
        out_t = jnp.dot(sel_ref[...], m,  # [C, W*C] @ [W*C, TILE_N] -> [C, TILE_N]
                        preferred_element_type=jnp.float32)
        out_ref[0] = out_t.astype(out_ref.dtype)


def basic_feature_sampling(voxel_features, vertices, pad_img_shape=None):
    """voxel_features: [B, C, D, H, W] (NCDHW), vertices: [B, N, 3] in [-1, 1].

    Returns [B, N, C], matching the PyTorch module.
    """
    del pad_img_shape  # unused, mirrors the PyTorch module signature
    B, C, D, H, W = voxel_features.shape
    N = vertices.shape[1]
    DH, WC = D * H, W * C
    out_dtype = voxel_features.dtype

    # bf16 volumes stay bf16 on the MXU (f32 accumulate); everything else -> f32.
    vol_dtype = jnp.bfloat16 if voxel_features.dtype == jnp.bfloat16 else jnp.float32

    # [B, C, D, H, W] -> [B, W*C, D*H]  (separable-sampling layout; see TODO above)
    vol = jnp.transpose(voxel_features, (0, 4, 1, 2, 3)).reshape(B, WC, DH)
    vol = vol.astype(vol_dtype)

    # vertices -> [B, 3, N]: lane-dense per-vertex math in the kernel.
    verts = jnp.transpose(vertices.astype(jnp.float32), (0, 2, 1))

    # ---- tile sizing -------------------------------------------------------
    # N tile (parallel axis): full N if small, else 128-vertex tiles (pad N).
    TILE_N = N if N <= 128 else 128
    n_pad = -(-N // TILE_N) * TILE_N
    if n_pad != N:
        verts = jnp.pad(verts, ((0, 0), (0, 0), (0, n_pad - N)))

    # DH tile (reduction axis): keep one vol buffer <= ~8 MiB so double
    # buffering + accumulator stay well inside scoped VMEM on v5e/v6e/v7x.
    bytes_per = jnp.dtype(vol_dtype).itemsize
    budget = 8 * 1024 * 1024
    max_dh = max(128, budget // max(1, WC * bytes_per))
    if DH <= max_dh:
        TILE_DH, dh_pad = DH, DH
    else:
        TILE_DH = max(128, (max_dh // 128) * 128)
        dh_pad = -(-DH // TILE_DH) * TILE_DH
    if dh_pad != DH:
        vol = jnp.pad(vol, ((0, 0), (0, 0), (0, dh_pad - DH)))

    # Static selection matrix folding the W*C lanes back to C channels.
    sel = (jnp.arange(WC, dtype=jnp.int32)[None, :] % C
           == jnp.arange(C, dtype=jnp.int32)[:, None]).astype(jnp.float32)

    kernel = functools.partial(_sample_kernel, D=D, H=H, W=W, C=C,
                               TILE_DH=TILE_DH)

    grid = (B, n_pad // TILE_N, dh_pad // TILE_DH)
    out_t = pl.pallas_call(
        kernel,
        out_shape=jax.ShapeDtypeStruct((B, C, n_pad), out_dtype),
        grid_spec=pltpu.PrefetchScalarGridSpec(
            num_scalar_prefetch=0,
            grid=grid,
            in_specs=[
                pl.BlockSpec((1, 3, TILE_N), lambda b, i, k: (b, 0, i)),
                pl.BlockSpec((1, WC, TILE_DH), lambda b, i, k: (b, 0, k)),
                pl.BlockSpec((C, WC), lambda b, i, k: (0, 0)),
            ],
            out_specs=pl.BlockSpec((1, C, TILE_N), lambda b, i, k: (b, 0, i)),
            scratch_shapes=[pltpu.VMEM((WC, TILE_N), jnp.float32)],
        ),
        compiler_params=pltpu.CompilerParams(
            dimension_semantics=("parallel", "parallel", "arbitrary"),
            vmem_limit_bytes=48 * 1024 * 1024,
        ),
    )(verts, vol, sel)

    out = jnp.transpose(out_t, (0, 2, 1))     # [B, n_pad, C]
    return out[:, :N, :]


def _ref_sample(voxel_features, vertices):
    """Independent pure-JAX reference (direct gather, no one-hot trick)."""
    B, C, D, H, W = voxel_features.shape

    def one(vol_b, verts_b):
        x = jnp.clip((verts_b[:, 0] + 1.0) * 0.5 * (W - 1), 0.0, W - 1)
        y = jnp.clip((verts_b[:, 1] + 1.0) * 0.5 * (H - 1), 0.0, H - 1)
        z = jnp.clip((verts_b[:, 2] + 1.0) * 0.5 * (D - 1), 0.0, D - 1)
        x0 = jnp.floor(x).astype(jnp.int32); x1 = jnp.minimum(x0 + 1, W - 1)
        y0 = jnp.floor(y).astype(jnp.int32); y1 = jnp.minimum(y0 + 1, H - 1)
        z0 = jnp.floor(z).astype(jnp.int32); z1 = jnp.minimum(z0 + 1, D - 1)
        wx1 = x - jnp.floor(x); wx0 = 1.0 - wx1
        wy1 = y - jnp.floor(y); wy0 = 1.0 - wy1
        wz1 = z - jnp.floor(z); wz0 = 1.0 - wz1

        def g(zi, yi, xi):
            return vol_b[:, zi, yi, xi]  # [C, N]

        out = (g(z0, y0, x0) * (wz0 * wy0 * wx0)
               + g(z0, y0, x1) * (wz0 * wy0 * wx1)
               + g(z0, y1, x0) * (wz0 * wy1 * wx0)
               + g(z0, y1, x1) * (wz0 * wy1 * wx1)
               + g(z1, y0, x0) * (wz1 * wy0 * wx0)
               + g(z1, y0, x1) * (wz1 * wy0 * wx1)
               + g(z1, y1, x0) * (wz1 * wy1 * wx0)
               + g(z1, y1, x1) * (wz1 * wy1 * wx1))
        return out.T  # [N, C]

    return jax.vmap(one)(voxel_features, vertices)


if __name__ == "__main__":
    key = jax.random.PRNGKey(0)
    k1, k2 = jax.random.split(key)

    B, C, D, H, W, N = 2, 8, 8, 8, 8, 16
    voxel_features = jax.random.normal(k1, (B, C, D, H, W), jnp.float32)
    # Some vertices slightly outside [-1, 1] to exercise 'border' padding.
    vertices = jax.random.uniform(k2, (B, N, 3), jnp.float32, -1.2, 1.2)
    pad_img_shape = (D, H, W)  # unused by the forward, kept for signature parity

    out = basic_feature_sampling(voxel_features, vertices, pad_img_shape)
    out = jax.block_until_ready(out)

    ref = _ref_sample(voxel_features, vertices)
    assert out.shape == (B, N, C)
    # (note: with bf16 volumes the tolerance would need to loosen to ~1e-2)
    assert jnp.allclose(out, ref, atol=1e-4, rtol=1e-4), \
        float(jnp.max(jnp.abs(out - ref)))

    print("KERNEL_OK")
</pallas_src>

<mosaic_0001>
module attributes {stable_mosaic.version = 11 : i64} {
  func.func @_sample_kernel(%arg0: i32, %arg1: i32, %arg2: i32, %arg3: memref<1x3x16xf32, #tpu.memory_space<vmem>>, %arg4: memref<1x64x64xf32, #tpu.memory_space<vmem>>, %arg5: memref<8x64xf32, #tpu.memory_space<vmem>>, %arg6: memref<1x8x16xf32, #tpu.memory_space<vmem>>, %arg7: memref<64x16xf32, #tpu.memory_space<vmem>>) attributes {dimension_semantics = [#tpu.dimension_semantics<parallel>, #tpu.dimension_semantics<parallel>, #tpu.dimension_semantics<arbitrary>], iteration_bounds = array<i64: 2, 1, 1>, scalar_prefetch = 0 : i64, scratch_operands = 1 : i64, tpu.core_type = #tpu.core_type<tc>, window_params = [{transform_indices = @transform_0, window_bounds = array<i64: 1, 3, 16>}, {transform_indices = @transform_1, window_bounds = array<i64: 1, 64, 64>}, {pipeline_mode = #tpu.pipeline_mode<synchronous>, transform_indices = @transform_2, window_bounds = array<i64: 8, 64>}, {transform_indices = @transform_3, window_bounds = array<i64: 1, 8, 16>}]} {
    %c0_i32 = arith.constant 0 : i32
    %0 = arith.cmpi eq, %arg2, %c0_i32 : i32
    %1 = arith.extui %0 : i1 to i32
    %c0_i32_0 = arith.constant 0 : i32
    %2 = arith.cmpi ne, %1, %c0_i32_0 : i32
    scf.if %2 {
      %cst_33 = arith.constant 0.000000e+00 : f32
      %101 = vector.broadcast %cst_33 : f32 to vector<64x16xf32>
      %c0_34 = arith.constant 0 : index
      %c0_35 = arith.constant 0 : index
      %102 = vector.load %arg7[%c0_34, %c0_35] : memref<64x16xf32, #tpu.memory_space<vmem>>, vector<64x16xf32>
      tpu.vector_store %arg7[%c0_34, %c0_35], %101 {strides = array<i32>} : memref<64x16xf32, #tpu.memory_space<vmem>>, vector<64x16xf32>,
    } else {
    }
    %c0 = arith.constant 0 : index
    %c0_1 = arith.constant 0 : index
    %c0_2 = arith.constant 0 : index
    %3 = vector.load %arg3[%c0, %c0_1, %c0_2] : memref<1x3x16xf32, #tpu.memory_space<vmem>>, vector<1x3x16xf32>
    %4 = vector.shape_cast %3 : vector<1x3x16xf32> to vector<3x16xf32>
    %5 = vector.extract_strided_slice %4 {offsets = [1, 0], sizes = [1, 16], strides = [1, 1]} : vector<3x16xf32> to vector<1x16xf32>
    %6 = vector.extract_strided_slice %4 {offsets = [2, 0], sizes = [1, 16], strides = [1, 1]} : vector<3x16xf32> to vector<1x16xf32>
    %cst = arith.constant 1.000000e+00 : f32
    %7 = vector.broadcast %cst : f32 to vector<1x16xf32>
    %8 = arith.addf %5, %7 : vector<1x16xf32>
    %cst_3 = arith.constant 5.000000e-01 : f32
    %9 = vector.broadcast %cst_3 : f32 to vector<1x16xf32>
    %10 = arith.mulf %8, %9 : vector<1x16xf32>
    %cst_4 = arith.constant 7.000000e+00 : f32
    %11 = vector.broadcast %cst_4 : f32 to vector<1x16xf32>
    %12 = arith.mulf %10, %11 : vector<1x16xf32>
    %cst_5 = arith.constant 0.000000e+00 : f32
    %cst_6 = arith.constant 7.000000e+00 : f32
    %13 = vector.broadcast %cst_5 : f32 to vector<1x16xf32>
    %14 = arith.maximumf %13, %12 : vector<1x16xf32>
    %15 = vector.broadcast %cst_6 : f32 to vector<1x16xf32>
    %16 = arith.minimumf %15, %14 : vector<1x16xf32>
    %cst_7 = arith.constant 1.000000e+00 : f32
    %17 = vector.broadcast %cst_7 : f32 to vector<1x16xf32>
    %18 = arith.addf %6, %17 : vector<1x16xf32>
    %cst_8 = arith.constant 5.000000e-01 : f32
    %19 = vector.broadcast %cst_8 : f32 to vector<1x16xf32>
    %20 = arith.mulf %18, %19 : vector<1x16xf32>
    %cst_9 = arith.constant 7.000000e+00 : f32
    %21 = vector.broadcast %cst_9 : f32 to vector<1x16xf32>
    %22 = arith.mulf %20, %21 : vector<1x16xf32>
    %cst_10 = arith.constant 0.000000e+00 : f32
    %cst_11 = arith.constant 7.000000e+00 : f32
    %23 = vector.broadcast %cst_10 : f32 to vector<1x16xf32>
    %24 = arith.maximumf %23, %22 : vector<1x16xf32>
    %25 = vector.broadcast %cst_11 : f32 to vector<1x16xf32>
    %26 = arith.minimumf %25, %24 : vector<1x16xf32>
    %27 = math.floor %16 : vector<1x16xf32>
    %28 = math.floor %26 : vector<1x16xf32>
    %29 = arith.subf %16, %27 : vector<1x16xf32>
    %cst_12 = arith.constant 1.000000e+00 : f32
    %30 = vector.broadcast %cst_12 : f32 to vector<1x16xf32>
    %31 = arith.subf %30, %29 : vector<1x16xf32>
    %32 = arith.subf %26, %28 : vector<1x16xf32>
    %cst_13 = arith.constant 1.000000e+00 : f32
    %33 = vector.broadcast %cst_13 : f32 to vector<1x16xf32>
    %34 = arith.subf %33, %32 : vector<1x16xf32>
    %35 = arith.fptosi %27 : vector<1x16xf32> to vector<1x16xi32>
    %c1_i32 = arith.constant 1 : i32
    %36 = vector.broadcast %c1_i32 : i32 to vector<1x16xi32>
    %37 = arith.addi %35, %36 : vector<1x16xi32>
    %c7_i32 = arith.constant 7 : i32
    %38 = vector.broadcast %c7_i32 : i32 to vector<1x16xi32>
    %39 = arith.minsi %37, %38 : vector<1x16xi32>
    %40 = arith.fptosi %28 : vector<1x16xf32> to vector<1x16xi32>
    %c1_i32_14 = arith.constant 1 : i32
    %41 = vector.broadcast %c1_i32_14 : i32 to vector<1x16xi32>
    %42 = arith.addi %40, %41 : vector<1x16xi32>
    %c7_i32_15 = arith.constant 7 : i32
    %43 = vector.broadcast %c7_i32_15 : i32 to vector<1x16xi32>
    %44 = arith.minsi %42, %43 : vector<1x16xi32>
    %c8_i32 = arith.constant 8 : i32
    %45 = vector.broadcast %c8_i32 : i32 to vector<1x16xi32>
    %46 = arith.muli %40, %45 : vector<1x16xi32>
    %47 = arith.addi %46, %35 : vector<1x16xi32>
    %c8_i32_16 = arith.constant 8 : i32
    %48 = vector.broadcast %c8_i32_16 : i32 to vector<1x16xi32>
    %49 = arith.muli %40, %48 : vector<1x16xi32>
    %50 = arith.addi %49, %39 : vector<1x16xi32>
    %c8_i32_17 = arith.constant 8 : i32
    %51 = vector.broadcast %c8_i32_17 : i32 to vector<1x16xi32>
    %52 = arith.muli %44, %51 : vector<1x16xi32>
    %53 = arith.addi %52, %35 : vector<1x16xi32>
    %c8_i32_18 = arith.constant 8 : i32
    %54 = vector.broadcast %c8_i32_18 : i32 to vector<1x16xi32>
    %55 = arith.muli %44, %54 : vector<1x16xi32>
    %56 = arith.addi %55, %39 : vector<1x16xi32>
    %57 = arith.mulf %34, %31 : vector<1x16xf32>
    %58 = arith.mulf %34, %29 : vector<1x16xf32>
    %59 = arith.mulf %32, %31 : vector<1x16xf32>
    %60 = arith.mulf %32, %29 : vector<1x16xf32>
    %61 = tpu.iota {dimensions = array<i32: 0>} : vector<64x16xi32>
    %c64_i32 = arith.constant 64 : i32
    %62 = arith.muli %arg2, %c64_i32 : i32
    %63 = vector.broadcast %62 : i32 to vector<64x16xi32>
    %64 = arith.addi %61, %63 : vector<64x16xi32>
    %65 = vector.broadcast %47 : vector<1x16xi32> to vector<64x16xi32>
    %66 = arith.cmpi eq, %64, %65 : vector<64x16xi32>
    %cst_19 = arith.constant 0.000000e+00 : f32
    %67 = vector.shape_cast %57 : vector<1x16xf32> to vector<1x16xf32>
    %68 = vector.broadcast %67 : vector<1x16xf32> to vector<64x16xf32>
    %69 = vector.broadcast %cst_19 : f32 to vector<64x16xf32>
    %70 = arith.select %66, %68, %69 : vector<64x16xi1>, vector<64x16xf32>
    %71 = vector.broadcast %50 : vector<1x16xi32> to vector<64x16xi32>
    %72 = arith.cmpi eq, %64, %71 : vector<64x16xi32>
    %cst_20 = arith.constant 0.000000e+00 : f32
    %73 = vector.shape_cast %58 : vector<1x16xf32> to vector<1x16xf32>
    %74 = vector.broadcast %73 : vector<1x16xf32> to vector<64x16xf32>
    %75 = vector.broadcast %cst_20 : f32 to vector<64x16xf32>
    %76 = arith.select %72, %74, %75 : vector<64x16xi1>, vector<64x16xf32>
    %77 = arith.addf %70, %76 : vector<64x16xf32>
    %78 = vector.broadcast %53 : vector<1x16xi32> to vector<64x16xi32>
    %79 = arith.cmpi eq, %64, %78 : vector<64x16xi32>
    %cst_21 = arith.constant 0.000000e+00 : f32
    %80 = vector.shape_cast %59 : vector<1x16xf32> to vector<1x16xf32>
    %81 = vector.broadcast %80 : vector<1x16xf32> to vector<64x16xf32>
    %82 = vector.broadcast %cst_21 : f32 to vector<64x16xf32>
    %83 = arith.select %79, %81, %82 : vector<64x16xi1>, vector<64x16xf32>
    %84 = arith.addf %77, %83 : vector<64x16xf32>
    %85 = vector.broadcast %56 : vector<1x16xi32> to vector<64x16xi32>
    %86 = arith.cmpi eq, %64, %85 : vector<64x16xi32>
    %cst_22 = arith.constant 0.000000e+00 : f32
    %87 = vector.shape_cast %60 : vector<1x16xf32> to vector<1x16xf32>
    %88 = vector.broadcast %87 : vector<1x16xf32> to vector<64x16xf32>
    %89 = vector.broadcast %cst_22 : f32 to vector<64x16xf32>
    %90 = arith.select %86, %88, %89 : vector<64x16xi1>, vector<64x16xf32>
    %91 = arith.addf %84, %90 : vector<64x16xf32>
    %c0_23 = arith.constant 0 : index
    %c0_24 = arith.constant 0 : index
    %c0_25 = arith.constant 0 : index
    %92 = vector.load %arg4[%c0_23, %c0_24, %c0_25] : memref<1x64x64xf32, #tpu.memory_space<vmem>>, vector<1x64x64xf32>
    %93 = vector.shape_cast %92 : vector<1x64x64xf32> to vector<64x64xf32>
    %c0_26 = arith.constant 0 : index
    %c0_27 = arith.constant 0 : index
    %94 = vector.load %arg7[%c0_26, %c0_27] : memref<64x16xf32, #tpu.memory_space<vmem>>, vector<64x16xf32>
    %cst_28 = arith.constant dense<0.000000e+00> : vector<64x16xf32>
    %95 = tpu.matmul %93, %91, %cst_28 {dimension_numbers = #tpu.dot_dimension_numbers<[1], [0], [0], [1], [0, 0, 1, 1], [], []>} : vector<64x64xf32>, vector<64x16xf32>, vector<64x16xf32> -> vector<64x16xf32>
    %96 = arith.addf %94, %95 : vector<64x16xf32>
    %c0_29 = arith.constant 0 : index
    %c0_30 = arith.constant 0 : index
    %97 = vector.load %arg7[%c0_29, %c0_30] : memref<64x16xf32, #tpu.memory_space<vmem>>, vector<64x16xf32>
    tpu.vector_store %arg7[%c0_29, %c0_30], %96 {strides = array<i32>} : memref<64x16xf32, #tpu.memory_space<vmem>>, vector<64x16xf32>,
    %c0_i32_31 = arith.constant 0 : i32
    %98 = arith.cmpi eq, %arg2, %c0_i32_31 : i32
    %99 = arith.extui %98 : i1 to i32
    %c0_i32_32 = arith.constant 0 : i32
    %100 = arith.cmpi ne, %99, %c0_i32_32 : i32
    scf.if %100 {
      %101 = vector.extract_strided_slice %4 {offsets = [0, 0], sizes = [1, 16], strides = [1, 1]} : vector<3x16xf32> to vector<1x16xf32>
      %cst_33 = arith.constant 1.000000e+00 : f32
      %102 = vector.broadcast %cst_33 : f32 to vector<1x16xf32>
      %103 = arith.addf %101, %102 : vector<1x16xf32>
      %cst_34 = arith.constant 5.000000e-01 : f32
      %104 = vector.broadcast %cst_34 : f32 to vector<1x16xf32>
      %105 = arith.mulf %103, %104 : vector<1x16xf32>
      %cst_35 = arith.constant 7.000000e+00 : f32
      %106 = vector.broadcast %cst_35 : f32 to vector<1x16xf32>
      %107 = arith.mulf %105, %106 : vector<1x16xf32>
      %cst_36 = arith.constant 0.000000e+00 : f32
      %cst_37 = arith.constant 7.000000e+00 : f32
      %108 = vector.broadcast %cst_36 : f32 to vector<1x16xf32>
      %109 = arith.maximumf %108, %107 : vector<1x16xf32>
      %110 = vector.broadcast %cst_37 : f32 to vector<1x16xf32>
      %111 = arith.minimumf %110, %109 : vector<1x16xf32>
      %112 = math.floor %111 : vector<1x16xf32>
      %113 = arith.subf %111, %112 : vector<1x16xf32>
      %cst_38 = arith.constant 1.000000e+00 : f32
      %114 = vector.broadcast %cst_38 : f32 to vector<1x16xf32>
      %115 = arith.subf %114, %113 : vector<1x16xf32>
      %116 = arith.fptosi %112 : vector<1x16xf32> to vector<1x16xi32>
      %c1_i32_39 = arith.constant 1 : i32
      %117 = vector.broadcast %c1_i32_39 : i32 to vector<1x16xi32>
      %118 = arith.addi %116, %117 : vector<1x16xi32>
      %c7_i32_40 = arith.constant 7 : i32
      %119 = vector.broadcast %c7_i32_40 : i32 to vector<1x16xi32>
      %120 = arith.minsi %118, %119 : vector<1x16xi32>
      %121 = tpu.iota {dimensions = array<i32: 0>} : vector<64x16xi32>
      %c8_i32_41 = arith.constant 8 : i32
      %122 = vector.broadcast %c8_i32_41 : i32 to vector<1x16xi32>
      %123 = arith.muli %116, %122 : vector<1x16xi32>
      %c8_i32_42 = arith.constant 8 : i32
      %124 = vector.broadcast %c8_i32_42 : i32 to vector<1x16xi32>
      %125 = arith.muli %120, %124 : vector<1x16xi32>
      %126 = vector.broadcast %123 : vector<1x16xi32> to vector<64x16xi32>
      %127 = arith.cmpi sge, %121, %126 : vector<64x16xi32>
      %c8_i32_43 = arith.constant 8 : i32
      %128 = vector.broadcast %c8_i32_43 : i32 to vector<1x16xi32>
      %129 = arith.addi %123, %128 : vector<1x16xi32>
      %130 = vector.broadcast %129 : vector<1x16xi32> to vector<64x16xi32>
      %131 = arith.cmpi slt, %121, %130 : vector<64x16xi32>
      %132 = arith.andi %127, %131 : vector<64x16xi1>
      %cst_44 = arith.constant 0.000000e+00 : f32
      %133 = vector.shape_cast %115 : vector<1x16xf32> to vector<1x16xf32>
      %134 = vector.broadcast %133 : vector<1x16xf32> to vector<64x16xf32>
      %135 = vector.broadcast %cst_44 : f32 to vector<64x16xf32>
      %136 = arith.select %132, %134, %135 : vector<64x16xi1>, vector<64x16xf32>
      %137 = vector.broadcast %125 : vector<1x16xi32> to vector<64x16xi32>
      %138 = arith.cmpi sge, %121, %137 : vector<64x16xi32>
      %c8_i32_45 = arith.constant 8 : i32
      %139 = vector.broadcast %c8_i32_45 : i32 to vector<1x16xi32>
      %140 = arith.addi %125, %139 : vector<1x16xi32>
      %141 = vector.broadcast %140 : vector<1x16xi32> to vector<64x16xi32>
      %142 = arith.cmpi slt, %121, %141 : vector<64x16xi32>
      %143 = arith.andi %138, %142 : vector<64x16xi1>
      %cst_46 = arith.constant 0.000000e+00 : f32
      %144 = vector.shape_cast %113 : vector<1x16xf32> to vector<1x16xf32>
      %145 = vector.broadcast %144 : vector<1x16xf32> to vector<64x16xf32>
      %146 = vector.broadcast %cst_46 : f32 to vector<64x16xf32>
      %147 = arith.select %143, %145, %146 : vector<64x16xi1>, vector<64x16xf32>
      %148 = arith.addf %136, %147 : vector<64x16xf32>
      %c0_47 = arith.constant 0 : index
      %c0_48 = arith.constant 0 : index
      %149 = vector.load %arg7[%c0_47, %c0_48] : memref<64x16xf32, #tpu.memory_space<vmem>>, vector<64x16xf32>
      %150 = arith.mulf %149, %148 : vector<64x16xf32>
      %c0_49 = arith.constant 0 : index
      %c0_50 = arith.constant 0 : index
      %151 = vector.load %arg5[%c0_49, %c0_50] : memref<8x64xf32, #tpu.memory_space<vmem>>, vector<8x64xf32>
      %cst_51 = arith.constant dense<0.000000e+00> : vector<8x16xf32>
      %152 = tpu.matmul %151, %150, %cst_51 {dimension_numbers = #tpu.dot_dimension_numbers<[1], [0], [0], [1], [0, 0, 1, 1], [], []>} : vector<8x64xf32>, vector<64x16xf32>, vector<8x16xf32> -> vector<8x16xf32>
      %c0_52 = arith.constant 0 : index
      %c0_53 = arith.constant 0 : index
      %c0_54 = arith.constant 0 : index
      %153 = vector.load %arg6[%c0_52, %c0_53, %c0_54] : memref<1x8x16xf32, #tpu.memory_space<vmem>>, vector<1x8x16xf32>
      %154 = vector.shape_cast %153 : vector<1x8x16xf32> to vector<8x16xf32>
      %155 = vector.shape_cast %152 : vector<8x16xf32> to vector<1x8x16xf32>
      tpu.vector_store %arg6[%c0_52, %c0_53, %c0_54], %155 {strides = array<i32>} : memref<1x8x16xf32, #tpu.memory_space<vmem>>, vector<1x8x16xf32>,
    } else {
    }
    return
  }
  func.func @transform_0(%arg0: i32, %arg1: i32, %arg2: i32) -> (i32, i32, i32) {
    %c0_i32 = arith.constant 0 : i32
    %c0_i32_0 = arith.constant 0 : i32
    return %arg0, %c0_i32, %arg1 : i32, i32, i32
  }
  func.func @transform_1(%arg0: i32, %arg1: i32, %arg2: i32) -> (i32, i32, i32) {
    %c0_i32 = arith.constant 0 : i32
    %c0_i32_0 = arith.constant 0 : i32
    return %arg0, %c0_i32, %arg2 : i32, i32, i32
  }
  func.func @transform_2(%arg0: i32, %arg1: i32, %arg2: i32) -> (i32, i32) {
    %c0_i32 = arith.constant 0 : i32
    %c0_i32_0 = arith.constant 0 : i32
    %c0_i32_1 = arith.constant 0 : i32
    return %c0_i32, %c0_i32_0 : i32, i32
  }
  func.func @transform_3(%arg0: i32, %arg1: i32, %arg2: i32) -> (i32, i32, i32) {
    %c0_i32 = arith.constant 0 : i32
    %c0_i32_0 = arith.constant 0 : i32
    return %arg0, %c0_i32, %arg1 : i32, i32, i32
  }
}

</mosaic_0001>

<llo_original>
// kernel: tpu_custom_call.1
$region0: #{tpu_custom_call.1}
  #allocation0 [shape = 'u32[]', space=smem, size = 0x4, offset = 0x4, fixed_abs, tag = 'smem constant byte address 0x4 - core index']
  #allocation1 [shape = 'u32[144,128]{1,0:T(1,128)}', space=vmem, size = 0x12000, scoped, tag = 'internal scratch']
  #allocation2 [shape = 'f32[64,16]{1,0:T(8,128)}', space=vmem, size = 0x8000, scoped, tag = 'scratch operand']
  %s0 = inlined_call_operand.vmem [shape: f32[2,3,16], index: 0, kind: input, shape index: {}]
  %s1 = inlined_call_operand.hbm [shape: f32[2,64,64], index: 1, kind: input, shape index: {}]
  %s2 = inlined_call_operand.vmem [shape: f32[8,64], index: 2, kind: input, shape index: {}]
  %s3 = inlined_call_operand.hbm [shape: f32[2,8,16], index: 3, kind: output, shape index: {}]
  %s4 = sld [smem:[#allocation0]]
  $region57: #{tpu_custom_call.1} parent=0
    _
  %s6 = ssub.s32 1, %s4
  %s7 = scalar_select 0, %s6, %s4
  $region1: #{tpu_custom_call.1} parent=0
    #allocation3 [shape = 'u8[65536]{0}', space=vmem, size = 0x10000, scoped, tag = 'input window, operand 1']
    #allocation4 [shape = 's32[2]{0}', space=sflag, size = 0x8, scoped, tag = 'scoped memory for tpu_custom_call.1']
    #allocation5 [shape = 's32[2]{0}', space=sflag, size = 0x8, scoped, tag = 'scoped memory for tpu_custom_call.1']
    #allocation6 [shape = 'u8[8192]{0}', space=vmem, size = 0x2000, scoped, tag = 'output window, operand 0']
    %8 = vsyncpa [#allocation4], 0
    %s9 = scalar_lea.sflag [#allocation4], 1
    %10 = vsyncpa %s9, 0
    %11 = vsyncpa [#allocation5], 0
    %s12 = scalar_lea.sflag [#allocation5], 1
    %13 = vsyncpa %s12, 0
    loop: start=0, step=1, limit=4
    $region2: #{tpu_custom_call.1} parent=1 // loop_pre_header
      _
    $region3: #{tpu_custom_call.1} parent=1 // loop_header
      %s15 = sphi 0, %s19
      %p16 = scmp.ge.s32.totalorder %s15, 4
      %s22 = sphi 0, %s41
      %s23 = sphi 0, %s37
      %s24 = sphi 0, %s33
      %s25 = sphi 0, %s22
      %s26 = sphi 0, %s23
      %s27 = sphi 0, %s24
      %s28 = sphi 0, %s25
      %s29 = sphi 0, %s26
      %s30 = sphi 0, %s27
      %s46 = sphi 0, %s48
      %s49 = sphi 0, %s46
      %s50 = sphi 0, %s49
      %s66 = sphi 0, %s50
      %s74 = sphi 0, %s76
      %s77 = sphi 0, %s74
      %s78 = sphi 0, %s77
      %s94 = sphi 0, %s78
      %s98 = sphi 0, %s98
      %s100 = sphi 0, %s98
      %s101 = sphi 0, %s100
      %s115 = sphi 0, %s101
      %s123 = sphi 0, %s125
      %s126 = sphi 0, %s123
      %s127 = sphi 0, %s126
      %s143 = sphi 0, %s127
    $region4: #{tpu_custom_call.1} parent=1 // loop_header_branch
      %18 = sbr.rel (%p16) target = $region8
    $region5: #{tpu_custom_call.1} parent=1 // loop_body
      %s20 = ssub.s32 %s15, 1
      %s21 = ssub.s32 %s15, 2
      %s31 = sadd.s32 1, %s24
      %p32 = scmp.ge.s32.totalorder %s31, 1
      %s33 = scalar_select %p32, 0, %s31
      %s34 = sadd.s32 1, %s23
      %s35 = scalar_select %p32, %s34, %s23
      %p36 = scmp.ge.s32.totalorder %s35, 1
      %s37 = scalar_select %p36, 0, %s35
      %s38 = sadd.s32 1, %s22
      %s39 = scalar_select %p36, %s38, %s22
      %p40 = scmp.ge.s32.totalorder %s39, 2
      %s41 = scalar_select %p40, 0, %s39
      %s42 = ssub.s32 %s22, %s41
      %s43 = ssub.s32 %s23, %s37
      %s44 = sor.u32 %s42, %s43
      %p45 = scmp.eq.s32.totalorder %s44, 0
      %s47 = sadd.s32 %s46, 1
      %s48 = scalar_select %p45, %s46, %s47
      %p51 = pneg %p45
      %p52 = scmp.eq.s32.totalorder %s15, 1
      %p53 = por %p51, %p52
      %p54 = scmp.ne.s32.totalorder %s46, %s49
      %p55 = scmp.eq.s32.totalorder %s15, 0
      %p56 = por %p54, %p55
      %p57 = scmp.ne.s32.totalorder %s46, %s49
      %p58 = scmp.eq.s32.totalorder %s20, 1
      %p59 = por %p57, %p58
      %p60 = scmp.ne.s32.totalorder %s49, %s50
      %p61 = scmp.eq.s32.totalorder %s20, 0
      %p62 = por %p60, %p61
      %p63 = scmp.ne.s32.totalorder %s49, %s50
      %p64 = scmp.eq.s32.totalorder %s21, 1
      %p65 = por %p63, %p64
      %p67 = scmp.ne.s32.totalorder %s50, %s66
      %p68 = scmp.eq.s32.totalorder %s21, 0
      %p69 = por %p67, %p68
      %s70 = ssub.s32 %s22, %s41
      %s71 = ssub.s32 %s24, %s33
      %s72 = sor.u32 %s70, %s71
      %p73 = scmp.eq.s32.totalorder %s72, 0
      %s75 = sadd.s32 %s74, 1
      %s76 = scalar_select %p73, %s74, %s75
      %p79 = pneg %p73
      %p80 = scmp.eq.s32.totalorder %s15, 1
      %p81 = por %p79, %p80
      %p82 = scmp.ne.s32.totalorder %s74, %s77
      %p83 = scmp.eq.s32.totalorder %s15, 0
      %p84 = por %p82, %p83
      %p85 = scmp.ne.s32.totalorder %s74, %s77
      %p86 = scmp.eq.s32.totalorder %s20, 1
      %p87 = por %p85, %p86
      %p88 = scmp.ne.s32.totalorder %s77, %s78
      %p89 = scmp.eq.s32.totalorder %s20, 0
      %p90 = por %p88, %p89
      %p91 = scmp.ne.s32.totalorder %s77, %s78
      %p92 = scmp.eq.s32.totalorder %s21, 1
      %p93 = por %p91, %p92
      %p95 = scmp.ne.s32.totalorder %s78, %s94
      %p96 = scmp.eq.s32.totalorder %s21, 0
      %p97 = por %p95, %p96
      %s99 = sadd.s32 %s98, 1
      %p102 = scmp.eq.s32.totalorder %s15, 1
      %p103 = scmp.ne.s32.totalorder %s98, %s100
      %p104 = scmp.eq.s32.totalorder %s15, 0
      %p105 = por %p103, %p104
      %p106 = scmp.ne.s32.totalorder %s98, %s100
      %p107 = scmp.eq.s32.totalorder %s20, 1
      %p108 = por %p106, %p107
      %p109 = scmp.ne.s32.totalorder %s100, %s101
      %p110 = scmp.eq.s32.totalorder %s20, 0
      %p111 = por %p109, %p110
      %p112 = scmp.ne.s32.totalorder %s100, %s101
      %p113 = scmp.eq.s32.totalorder %s21, 1
      %p114 = por %p112, %p113
      %p116 = scmp.ne.s32.totalorder %s101, %s115
      %p117 = scmp.eq.s32.totalorder %s21, 0
      %p118 = por %p116, %p117
      %s119 = ssub.s32 %s22, %s41
      %s120 = ssub.s32 %s23, %s37
      %s121 = sor.u32 %s119, %s120
      %p122 = scmp.eq.s32.totalorder %s121, 0
      %s124 = sadd.s32 %s123, 1
      %s125 = scalar_select %p122, %s123, %s124
      %p128 = pneg %p122
      %p129 = scmp.eq.s32.totalorder %s15, 1
      %p130 = por %p128, %p129
      %p131 = scmp.ne.s32.totalorder %s123, %s126
      %p132 = scmp.eq.s32.totalorder %s15, 0
      %p133 = por %p131, %p132
      %p134 = scmp.ne.s32.totalorder %s123, %s126
      %p135 = scmp.eq.s32.totalorder %s20, 1
      %p136 = por %p134, %p135
      %p137 = scmp.ne.s32.totalorder %s126, %s127
      %p138 = scmp.eq.s32.totalorder %s20, 0
      %p139 = por %p137, %p138
      %p140 = scmp.ne.s32.totalorder %s126, %s127
      %p141 = scmp.eq.s32.totalorder %s21, 1
      %p142 = por %p140, %p141
      %p144 = scmp.ne.s32.totalorder %s127, %s143
      %p145 = scmp.eq.s32.totalorder %s21, 0
      %p146 = por %p144, %p145
      %p147 = scmp.le.s32.totalorder 1, %s15
      %p148 = scmp.lt.s32.totalorder %s15, 3
      %p149 = pnand %p147, %p148
      %p150 = pneg %p149
      // Predicated region
      $region9: #{tpu_custom_call.1} parent=5 // pred_check
        _
      $region10: #{tpu_custom_call.1} parent=5 // pred_check_branch
        %152 = sbr.rel (%p149) target = $region12
      $region11: #{tpu_custom_call.1} parent=5 // pred_region
        %s153 = ssub.s32 %s15, 1
        // Predicated region
        $region13: #{tpu_custom_call.1} parent=11 // pred_check
          %p154 = pneg %p111
        $region14: #{tpu_custom_call.1} parent=11 // pred_check_branch
          %156 = sbr.rel (%p154) target = $region16
        $region15: #{tpu_custom_call.1} parent=11 // pred_region
          _
        $region16: #{tpu_custom_call.1} parent=11 // pred_fallthru
          _
      $region12: #{tpu_custom_call.1} parent=5 // pred_fallthru
        _
      %p157 = scmp.lt.s32.totalorder %s15, 2
      // Predicated region
      $region17: #{tpu_custom_call.1} parent=5 // pred_check
        %p158 = pneg %p157
      $region18: #{tpu_custom_call.1} parent=5 // pred_check_branch
        %160 = sbr.rel (%p158) target = $region20
      $region19: #{tpu_custom_call.1} parent=5 // pred_region
        // Predicated region
        $region21: #{tpu_custom_call.1} parent=19 // pred_check
          %p161 = pneg %p56
        $region22: #{tpu_custom_call.1} parent=19 // pred_check_branch
          %163 = sbr.rel (%p161) target = $region24
        $region23: #{tpu_custom_call.1} parent=19 // pred_region
          %p164 = scmp.lt.s32.totalorder %s22, 1
          %s165 = scalar_select %p164, %s22, 1
          %p166 = scmp.lt.s32.totalorder %s23, 0
          %s167 = scalar_select %p166, %s23, 0
          %s168 = sadd.s32 %s167, %s165
          %s169 = smul.addr %s168, 4
          %s170 = scalar_lea.vmem %s0, %s169
        $region24: #{tpu_custom_call.1} parent=19 // pred_fallthru
          _
        // Predicated region
        $region25: #{tpu_custom_call.1} parent=19 // pred_check
          %p171 = pneg %p84
        $region26: #{tpu_custom_call.1} parent=19 // pred_check_branch
          %173 = sbr.rel (%p171) target = $region28
        $region27: #{tpu_custom_call.1} parent=19 // pred_region
          %s174 = sand.u32 %s74, 1
          %s175 = scalar_lea.sflag [#allocation4], %s174
          %s176 = sand.u32 %s74, 1
          %s177 = smul.addr %s176, 64
          %s178 = scalar_lea.vmem [#allocation3], %s177
          %s180 = ssub.s32 1024, 1024
          %181 = vsyncadd %s175, %s180
          %s182 = smul.addr %s22, 8
          %s183 = sadd.s32 %s24, %s182
          %s184 = smul.addr %s183, 128
          %s185 = scalar_lea.hbm %s1, %s184
          %s186 = sshll.u32 %s178, 4
          %s187 = int_to_ptr.vmem [resolvable:$true] %s186
          %192 = dma.hbm_to_vmem [thread:$0]  %s185, 1024, %s187, %s175, 128, 128, 8
        $region28: #{tpu_custom_call.1} parent=19 // pred_fallthru
          _
      $region20: #{tpu_custom_call.1} parent=5 // pred_fallthru
        _
      %p193 = scmp.le.s32.totalorder 1, %s15
      %p194 = scmp.lt.s32.totalorder %s15, 3
      %p195 = pnand %p193, %p194
      %p196 = pneg %p195
      // Predicated region
      $region29: #{tpu_custom_call.1} parent=5 // pred_check
        _
      $region30: #{tpu_custom_call.1} parent=5 // pred_check_branch
        %198 = sbr.rel (%p195) target = $region32
      $region31: #{tpu_custom_call.1} parent=5 // pred_region
        %s199 = ssub.s32 %s15, 1
        %s200 = sand.u32 %s77, 1
        %s201 = scalar_lea.sflag [#allocation4], %s200
        %s202 = sand.u32 %s77, 1
        %s203 = smul.addr %s202, 64
        %s204 = scalar_lea.vmem [#allocation3], %s203
        // Predicated region
        $region33: #{tpu_custom_call.1} parent=31 // pred_check
          %p205 = pneg %p90
        $region34: #{tpu_custom_call.1} parent=31 // pred_check_branch
          %207 = sbr.rel (%p205) target = $region36
        $region35: #{tpu_custom_call.1} parent=31 // pred_region
          %208 = dma.done %s201, 1024
        $region36: #{tpu_custom_call.1} parent=31 // pred_fallthru
          _
        %p209 = scmp.lt.s32.totalorder %s25, 1
        %s210 = scalar_select %p209, %s25, 1
        %p211 = scmp.lt.s32.totalorder %s26, 0
        %s212 = scalar_select %p211, %s26, 0
        %s213 = sadd.s32 %s212, %s210
        %s214 = smul.addr %s213, 4
        %s215 = scalar_lea.vmem %s0, %s214
        %p216 = pneg %p62
        %p217 = pneg %p59
        %s218 = sand.u32 %s77, 1
        %s219 = scalar_lea.sflag [#allocation4], %s218
        %s220 = sand.u32 %s77, 1
        %s221 = smul.addr %s220, 64
        %s222 = scalar_lea.vmem [#allocation3], %s221
        %p223 = pneg %p90
        %p224 = pneg %p87
        %p225 = pneg %p111
        %p226 = pneg %p108
        %p227 = pneg %p139
        %p228 = pneg %p136
        %s229 = sand.u32 %s126, 1
        %s230 = scalar_lea.sflag [#allocation5], %s229
        %s231 = sand.u32 %s126, 1
        %s232 = smul.addr %s231, 8
        %s233 = scalar_lea.vmem [#allocation6], %s232
        %p234 = scmp.lt.s32.totalorder %s25, 1
        %s235 = scalar_select %p234, %s25, 1
        %p236 = scmp.lt.s32.totalorder %s26, 0
        %s237 = scalar_select %p236, %s26, 0
        %s238 = sadd.s32 %s237, %s235
        %s239 = smul.addr %s238, 4
        %s240 = scalar_lea.vmem %s0, %s239
        %p241 = scmp.eq.s32.totalorder %s27, 0
        // Predicated region
        $region37: #{tpu_custom_call.1} parent=31 // pred_check
          %p242 = pneg %p241
        $region38: #{tpu_custom_call.1} parent=31 // pred_check_branch
          %244 = sbr.rel (%p242) target = $region40
        $region39: #{tpu_custom_call.1} parent=31 // pred_region
          %vm245 = vcmask 130048
          %246 = vst.msk [vmem:[#allocation2] sm:$0xff] %vm245, 0.0
          %247 = vst.msk [vmem:[#allocation2 + $0x8] sm:$0xff] %vm245, 0.0
          %248 = vst.msk [vmem:[#allocation2 + $0x10] sm:$0xff] %vm245, 0.0
          %249 = vst.msk [vmem:[#allocation2 + $0x18] sm:$0xff] %vm245, 0.0
          %250 = vst.msk [vmem:[#allocation2 + $0x20] sm:$0xff] %vm245, 0.0
          %251 = vst.msk [vmem:[#allocation2 + $0x28] sm:$0xff] %vm245, 0.0
          %252 = vst.msk [vmem:[#allocation2 + $0x30] sm:$0xff] %vm245, 0.0
          %253 = vst.msk [vmem:[#allocation2 + $0x38] sm:$0xff] %vm245, 0.0
        $region40: #{tpu_custom_call.1} parent=31 // pred_fallthru
          _
        %v254 = vld [vmem:[%s240] sm:$0x7]
        %v255 = vadd.f32 %v254, 1.0
        %v256 = vmul.f32 %v255, 0.5
        %v257 = vmul.f32 %v256, 7.0
        %v258 = vmax.f32 %v257, 0.0
        %v259 = vmin.f32 %v258, 7.0
        %v260 = vfloor.f32 %v259
        %v261 = vsub.f32 %v259, %v260
        %v262 = vsub.f32 1.0, %v261
        %v263 = vcvt.f32.s32.to.zero.pseudo %v260
        %v264 = vadd.s32 %v263, 1
        %vm265 = vcmp.lt.s32.totalorder %v264, 7
        %v266 = vsel %vm265, %v264, 7
        %v267 = vmul.u32 %v263, 8
        %v268 = vrot.slane %v263, 7
        %v269 = vadd.s32 %v267, %v268
        %v270 = vrot.slane %v266, 7
        %v271 = vadd.s32 %v267, %v270
        %v272 = vmul.u32 %v266, 8
        %v273 = vadd.s32 %v272, %v268
        %v274 = vadd.s32 %v272, %v270
        %v276 = vrot.slane %v262, 7
        %v278 = vmul.f32 %v262, %v276
        %v280 = vrot.slane %v261, 7
        %v282 = vmul.f32 %v262, %v280
        %v283 = vmul.f32 %v261, %v276
        %v284 = vmul.f32 %v261, %v280
        %v285 = vlaneseq
        %v286 = vshrl.u32 %v285, 7
        %v287 = vadd.s32 %v286, 8
        %v288 = vadd.s32 %v286, 16
        %v289 = vadd.s32 %v286, 24
        %v290 = vadd.s32 %v286, 32
        %v291 = vadd.s32 %v286, 40
        %v292 = vadd.s32 %v286, 48
        %v293 = vadd.s32 %v286, 56
        %s294 = smul.u32 %s27, 64
        %v295 = vstv %s294
        %v296 = vadd.s32 %v286, %v295
        %v297 = vadd.s32 %v287, %v295
        %v298 = vadd.s32 %v288, %v295
        %v299 = vadd.s32 %v289, %v295
        %v300 = vadd.s32 %v290, %v295
        %v301 = vadd.s32 %v291, %v295
        %v302 = vadd.s32 %v292, %v295
        %v303 = vadd.s32 %v293, %v295
        %v304 = vlaneseq
        %v305 = vshrl.u32 %v304, 7
        %v306 = vsub.s32 2, %v305
        %v307 = vrot.slane %v269, %v306
        %vm308 = vcmp.eq.s32.totalorder %v296, %v307
        %vm309 = vcmp.eq.s32.totalorder %v297, %v307
        %vm310 = vcmp.eq.s32.totalorder %v298, %v307
        %vm311 = vcmp.eq.s32.totalorder %v299, %v307
        %vm312 = vcmp.eq.s32.totalorder %v300, %v307
        %vm313 = vcmp.eq.s32.totalorder %v301, %v307
        %vm314 = vcmp.eq.s32.totalorder %v302, %v307
        %vm315 = vcmp.eq.s32.totalorder %v303, %v307
        %v316 = vlaneseq
        %v317 = vshrl.u32 %v316, 7
        %v318 = vsub.s32 2, %v317
        %v319 = vrot.slane %v278, %v318
        %v320 = vsel %vm308, %v319, 0.0
        %v321 = vsel %vm309, %v319, 0.0
        %v322 = vsel %vm310, %v319, 0.0
        %v323 = vsel %vm311, %v319, 0.0
        %v324 = vsel %vm312, %v319, 0.0
        %v325 = vsel %vm313, %v319, 0.0
        %v326 = vsel %vm314, %v319, 0.0
        %v327 = vsel %vm315, %v319, 0.0
        %v328 = vlaneseq
        %v329 = vshrl.u32 %v328, 7
        %v330 = vsub.s32 2, %v329
        %v331 = vrot.slane %v271, %v330
        %vm332 = vcmp.eq.s32.totalorder %v296, %v331
        %vm333 = vcmp.eq.s32.totalorder %v297, %v331
        %vm334 = vcmp.eq.s32.totalorder %v298, %v331
        %vm335 = vcmp.eq.s32.totalorder %v299, %v331
        %vm336 = vcmp.eq.s32.totalorder %v300, %v331
        %vm337 = vcmp.eq.s32.totalorder %v301, %v331
        %vm338 = vcmp.eq.s32.totalorder %v302, %v331
        %vm339 = vcmp.eq.s32.totalorder %v303, %v331
        %v340 = vlaneseq
        %v341 = vshrl.u32 %v340, 7
        %v342 = vsub.s32 2, %v341
        %v343 = vrot.slane %v282, %v342
        %v344 = vsel %vm332, %v343, 0.0
        %v345 = vsel %vm333, %v343, 0.0
        %v346 = vsel %vm334, %v343, 0.0
        %v347 = vsel %vm335, %v343, 0.0
        %v348 = vsel %vm336, %v343, 0.0
        %v349 = vsel %vm337, %v343, 0.0
        %v350 = vsel %vm338, %v343, 0.0
        %v351 = vsel %vm339, %v343, 0.0
        %v352 = vadd.f32 %v320, %v344
        %v353 = vadd.f32 %v321, %v345
        %v354 = vadd.f32 %v322, %v346
        %v355 = vadd.f32 %v323, %v347
        %v356 = vadd.f32 %v324, %v348
        %v357 = vadd.f32 %v325, %v349
        %v358 = vadd.f32 %v326, %v350
        %v359 = vadd.f32 %v327, %v351
        %v360 = vlaneseq
        %v361 = vshrl.u32 %v360, 7
        %v362 = vsub.s32 2, %v361
        %v363 = vrot.slane %v273, %v362
        %vm364 = vcmp.eq.s32.totalorder %v296, %v363
        %vm365 = vcmp.eq.s32.totalorder %v297, %v363
        %vm366 = vcmp.eq.s32.totalorder %v298, %v363
        %vm367 = vcmp.eq.s32.totalorder %v299, %v363
        %vm368 = vcmp.eq.s32.totalorder %v300, %v363
        %vm369 = vcmp.eq.s32.totalorder %v301, %v363
        %vm370 = vcmp.eq.s32.totalorder %v302, %v363
        %vm371 = vcmp.eq.s32.totalorder %v303, %v363
        %v372 = vlaneseq
        %v373 = vshrl.u32 %v372, 7
        %v374 = vsub.s32 2, %v373
        %v375 = vrot.slane %v283, %v374
        %v376 = vsel %vm364, %v375, 0.0
        %v377 = vsel %vm365, %v375, 0.0
        %v378 = vsel %vm366, %v375, 0.0
        %v379 = vsel %vm367, %v375, 0.0
        %v380 = vsel %vm368, %v375, 0.0
        %v381 = vsel %vm369, %v375, 0.0
        %v382 = vsel %vm370, %v375, 0.0
        %v383 = vsel %vm371, %v375, 0.0
        %v384 = vadd.f32 %v352, %v376
        %v385 = vadd.f32 %v353, %v377
        %v386 = vadd.f32 %v354, %v378
        %v387 = vadd.f32 %v355, %v379
        %v388 = vadd.f32 %v356, %v380
        %v389 = vadd.f32 %v357, %v381
        %v390 = vadd.f32 %v358, %v382
        %v391 = vadd.f32 %v359, %v383
        %v392 = vlaneseq
        %v393 = vshrl.u32 %v392, 7
        %v394 = vsub.s32 2, %v393
        %v395 = vrot.slane %v274, %v394
        %vm396 = vcmp.eq.s32.totalorder %v296, %v395
        %vm397 = vcmp.eq.s32.totalorder %v297, %v395
        %vm398 = vcmp.eq.s32.totalorder %v298, %v395
        %vm399 = vcmp.eq.s32.totalorder %v299, %v395
        %vm400 = vcmp.eq.s32.totalorder %v300, %v395
        %vm401 = vcmp.eq.s32.totalorder %v301, %v395
        %vm402 = vcmp.eq.s32.totalorder %v302, %v395
        %vm403 = vcmp.eq.s32.totalorder %v303, %v395
        %v404 = vlaneseq
        %v405 = vshrl.u32 %v404, 7
        %v406 = vsub.s32 2, %v405
        %v407 = vrot.slane %v284, %v406
        %v408 = vsel %vm396, %v407, 0.0
        %v409 = vsel %vm397, %v407, 0.0
        %v410 = vsel %vm398, %v407, 0.0
        %v411 = vsel %vm399, %v407, 0.0
        %v412 = vsel %vm400, %v407, 0.0
        %v413 = vsel %vm401, %v407, 0.0
        %v414 = vsel %vm402, %v407, 0.0
        %v415 = vsel %vm403, %v407, 0.0
        %v416 = vadd.f32 %v384, %v408
        %v417 = vadd.f32 %v385, %v409
        %v418 = vadd.f32 %v386, %v410
        %v419 = vadd.f32 %v387, %v411
        %v420 = vadd.f32 %v388, %v412
        %v421 = vadd.f32 %v389, %v413
        %v422 = vadd.f32 %v390, %v414
        %v423 = vadd.f32 %v391, %v415
        %v424 = vld [vmem:[%s204] sm:$0xff]
        %v425 = vld [vmem:[%s204 + $0x8] sm:$0xff]
        %v426 = vld [vmem:[%s204 + $0x10] sm:$0xff]
        %v427 = vld [vmem:[%s204 + $0x18] sm:$0xff]
        %v428 = vld [vmem:[%s204 + $0x20] sm:$0xff]
        %v429 = vld [vmem:[%s204 + $0x28] sm:$0xff]
        %v430 = vld [vmem:[%s204 + $0x30] sm:$0xff]
        %v431 = vld [vmem:[%s204 + $0x38] sm:$0xff]
        %v432 = vld [vmem:[#allocation2] sm:$0xff]
        %v433 = vld [vmem:[#allocation2 + $0x8] sm:$0xff]
        %v434 = vld [vmem:[#allocation2 + $0x10] sm:$0xff]
        %v435 = vld [vmem:[#allocation2 + $0x18] sm:$0xff]
        %v436 = vld [vmem:[#allocation2 + $0x20] sm:$0xff]
        %v437 = vld [vmem:[#allocation2 + $0x28] sm:$0xff]
        %v438 = vld [vmem:[#allocation2 + $0x30] sm:$0xff]
        %v439 = vld [vmem:[#allocation2 + $0x38] sm:$0xff]
        %vm440 = vcmask 523264
        %v442 = vsel %vm440, %v424, 0
        %v445 = vsel %vm440, %v425, 0
        %v448 = vsel %vm440, %v426, 0
        %v451 = vsel %vm440, %v427, 0
        %v454 = vsel %vm440, %v428, 0
        %v457 = vsel %vm440, %v429, 0
        %v460 = vsel %vm440, %v430, 0
        %v463 = vsel %vm440, %v431, 0
        %465 = vmatprep.subr.mxu0 0.0
        %466 = vmatpush1.msra.mxu0 0.0
        %467 = vmatprep.subr.mxu0 0.0
        %468 = vmatpush1.msra.mxu0 0.0
        %469 = vmatprep.subr.mxu0 0.0
        %470 = vmatpush1.msra.mxu0 0.0
        %471 = vmatprep.subr.mxu0 0.0
        %472 = vmatpush1.msra.mxu0 0.0
        %473 = vmatprep.subr.mxu0 0.0
        %474 = vmatpush1.msra.mxu0 0.0
        %475 = vmatprep.subr.mxu0 0.0
        %476 = vmatpush1.msra.mxu0 0.0
        %477 = vmatprep.subr.mxu0 0.0
        %478 = vmatpush1.msra.mxu0 0.0
        %479 = vmatprep.subr.mxu0 0.0
        %480 = vmatpush1.msra.mxu0 0.0
        %481 = vmatprep.subr.mxu0 0.0
        %482 = vmatpush1.msra.mxu0 %v423
        %483 = vmatprep.subr.mxu0 0.0
        %484 = vmatpush1.msra.mxu0 %v422
        %485 = vmatprep.subr.mxu0 0.0
        %486 = vmatpush1.msra.mxu0 %v421
        %487 = vmatprep.subr.mxu0 0.0
        %488 = vmatpush1.msra.mxu0 %v420
        %489 = vmatprep.subr.mxu0 0.0
        %490 = vmatpush1.msra.mxu0 %v419
        %491 = vmatprep.subr.mxu0 0.0
        %492 = vmatpush1.msra.mxu0 %v418
        %493 = vmatprep.subr.mxu0 0.0
        %494 = vmatpush1.msra.mxu0 %v417
        %495 = vmatprep.subr.mxu0 0.0
        %496 = vmatpush1.msra.mxu0 %v416
        %497 = vmatprep.subr.mxu0 0.0
        %498 = vmatpush2.msra.mxu0 0.0
        %499 = vmatprep.subr.mxu0 0.0
        %500 = vmatpush2.msra.mxu0 0.0
        %501 = vmatprep.subr.mxu0 0.0
        %502 = vmatpush2.msra.mxu0 0.0
        %503 = vmatprep.subr.mxu0 0.0
        %504 = vmatpush2.msra.mxu0 0.0
        %505 = vmatprep.subr.mxu0 0.0
        %506 = vmatpush2.msra.mxu0 0.0
        %507 = vmatprep.subr.mxu0 0.0
        %508 = vmatpush2.msra.mxu0 0.0
        %509 = vmatprep.subr.mxu0 0.0
        %510 = vmatpush2.msra.mxu0 0.0
        %511 = vmatprep.subr.mxu0 0.0
        %512 = vmatpush2.msra.mxu0 0.0
        %513 = vmatprep.subr.mxu0 0.0
        %514 = vmatpush2.msra.mxu0 0.0
        %515 = vmatprep.subr.mxu0 0.0
        %516 = vmatpush2.msra.mxu0 0.0
        %517 = vmatprep.subr.mxu0 0.0
        %518 = vmatpush2.msra.mxu0 0.0
        %519 = vmatprep.subr.mxu0 0.0
        %520 = vmatpush2.msra.mxu0 0.0
        %521 = vmatprep.subr.mxu0 0.0
        %522 = vmatpush2.msra.mxu0 0.0
        %523 = vmatprep.subr.mxu0 0.0
        %524 = vmatpush2.msra.mxu0 0.0
        %525 = vmatprep.subr.mxu0 0.0
        %526 = vmatpush2.msra.mxu0 0.0
        %527 = vmatprep.subr.mxu0 0.0
        %528 = vmatpush2.msra.mxu0 0.0
        %529 = vmatprep.mubr.f32.mxu0 0.0
        %530 = vmatmul.mubr.f32.gmra.mxu0 %v442
        %v531 = vpop.f32.mrf.mxu0
        %v532 = vadd.f32 0.0, %v531
        %v533 = vpop.f32.mrf.mxu0
        %534 = vmatprep.mubr.f32.mxu0 0.0
        %535 = vmatmul.mubr.f32.gmra.mxu0 %v445
        %v536 = vpop.f32.mrf.mxu0
        %v537 = vadd.f32 0.0, %v536
        %v538 = vpop.f32.mrf.mxu0
        %539 = vmatprep.mubr.f32.mxu0 0.0
        %540 = vmatmul.mubr.f32.gmra.mxu0 %v448
        %v541 = vpop.f32.mrf.mxu0
        %v542 = vadd.f32 0.0, %v541
        %v543 = vpop.f32.mrf.mxu0
        %544 = vmatprep.mubr.f32.mxu0 0.0
        %545 = vmatmul.mubr.f32.gmra.mxu0 %v451
        %v546 = vpop.f32.mrf.mxu0
        %v547 = vadd.f32 0.0, %v546
        %v548 = vpop.f32.mrf.mxu0
        %549 = vmatprep.mubr.f32.mxu0 0.0
        %550 = vmatmul.mubr.f32.gmra.mxu0 %v454
        %v551 = vpop.f32.mrf.mxu0
        %v552 = vadd.f32 0.0, %v551
        %v553 = vpop.f32.mrf.mxu0
        %554 = vmatprep.mubr.f32.mxu0 0.0
        %555 = vmatmul.mubr.f32.gmra.mxu0 %v457
        %v556 = vpop.f32.mrf.mxu0
        %v557 = vadd.f32 0.0, %v556
        %v558 = vpop.f32.mrf.mxu0
        %559 = vmatprep.mubr.f32.mxu0 0.0
        %560 = vmatmul.mubr.f32.gmra.mxu0 %v460
        %v561 = vpop.f32.mrf.mxu0
        %v562 = vadd.f32 0.0, %v561
        %v563 = vpop.f32.mrf.mxu0
        %564 = vmatprep.mubr.f32.mxu0 0.0
        %565 = vmatmul.mubr.f32.gmra.mxu0 %v463
        %v566 = vpop.f32.mrf.mxu0
        %v567 = vadd.f32 0.0, %v566
        %v568 = vpop.f32.mrf.mxu0
        %569 = vdwg.mxu0
        %v570 = vadd.f32 %v432, %v532
        %v571 = vadd.f32 %v433, %v537
        %v572 = vadd.f32 %v434, %v542
        %v573 = vadd.f32 %v435, %v547
        %v574 = vadd.f32 %v436, %v552
        %v575 = vadd.f32 %v437, %v557
        %v576 = vadd.f32 %v438, %v562
        %v577 = vadd.f32 %v439, %v567
        %vm578 = vcmask 130048
        %579 = vst.msk [vmem:[#allocation2] sm:$0xff] %vm578, %v570
        %580 = vst.msk [vmem:[#allocation2 + $0x8] sm:$0xff] %vm578, %v571
        %581 = vst.msk [vmem:[#allocation2 + $0x10] sm:$0xff] %vm578, %v572
        %582 = vst.msk [vmem:[#allocation2 + $0x18] sm:$0xff] %vm578, %v573
        %583 = vst.msk [vmem:[#allocation2 + $0x20] sm:$0xff] %vm578, %v574
        %584 = vst.msk [vmem:[#allocation2 + $0x28] sm:$0xff] %vm578, %v575
        %585 = vst.msk [vmem:[#allocation2 + $0x30] sm:$0xff] %vm578, %v576
        %586 = vst.msk [vmem:[#allocation2 + $0x38] sm:$0xff] %vm578, %v577
        // Predicated region
        $region41: #{tpu_custom_call.1} parent=31 // pred_check
          %p587 = pneg %p241
        $region42: #{tpu_custom_call.1} parent=31 // pred_check_branch
          %589 = sbr.rel (%p587) target = $region44
        $region43: #{tpu_custom_call.1} parent=31 // pred_region
          %v590 = vlaneseq
          %v591 = vshrl.u32 %v590, 7
          %v592 = vsub.s32 0, %v591
          %v593 = vrot.slane %v267, %v592
          %vm594 = vcmp.ge.s32.totalorder %v286, %v593
          %vm595 = vcmp.ge.s32.totalorder %v287, %v593
          %vm596 = vcmp.ge.s32.totalorder %v288, %v593
          %vm597 = vcmp.ge.s32.totalorder %v289, %v593
          %vm598 = vcmp.ge.s32.totalorder %v290, %v593
          %vm599 = vcmp.ge.s32.totalorder %v291, %v593
          %vm600 = vcmp.ge.s32.totalorder %v292, %v593
          %vm601 = vcmp.ge.s32.totalorder %v293, %v593
          %v602 = vadd.s32 %v267, 8
          %v603 = vlaneseq
          %v604 = vshrl.u32 %v603, 7
          %v605 = vsub.s32 0, %v604
          %v606 = vrot.slane %v602, %v605
          %vm607 = vcmp.lt.s32.totalorder %v286, %v606
          %vm608 = vcmp.lt.s32.totalorder %v287, %v606
          %vm609 = vcmp.lt.s32.totalorder %v288, %v606
          %vm610 = vcmp.lt.s32.totalorder %v289, %v606
          %vm611 = vcmp.lt.s32.totalorder %v290, %v606
          %vm612 = vcmp.lt.s32.totalorder %v291, %v606
          %vm613 = vcmp.lt.s32.totalorder %v292, %v606
          %vm614 = vcmp.lt.s32.totalorder %v293, %v606
          %vm615 = vmand %vm594, %vm607
          %vm616 = vmand %vm595, %vm608
          %vm617 = vmand %vm596, %vm609
          %vm618 = vmand %vm597, %vm610
          %vm619 = vmand %vm598, %vm611
          %vm620 = vmand %vm599, %vm612
          %vm621 = vmand %vm600, %vm613
          %vm622 = vmand %vm601, %vm614
          %v623 = vlaneseq
          %v624 = vshrl.u32 %v623, 7
          %v625 = vsub.s32 0, %v624
          %v626 = vrot.slane %v262, %v625
          %v627 = vsel %vm615, %v626, 0.0
          %v628 = vsel %vm616, %v626, 0.0
          %v629 = vsel %vm617, %v626, 0.0
          %v630 = vsel %vm618, %v626, 0.0
          %v631 = vsel %vm619, %v626, 0.0
          %v632 = vsel %vm620, %v626, 0.0
          %v633 = vsel %vm621, %v626, 0.0
          %v634 = vsel %vm622, %v626, 0.0
          %v635 = vlaneseq
          %v636 = vshrl.u32 %v635, 7
          %v637 = vsub.s32 0, %v636
          %v638 = vrot.slane %v272, %v637
          %vm639 = vcmp.ge.s32.totalorder %v286, %v638
          %vm640 = vcmp.ge.s32.totalorder %v287, %v638
          %vm641 = vcmp.ge.s32.totalorder %v288, %v638
          %vm642 = vcmp.ge.s32.totalorder %v289, %v638
          %vm643 = vcmp.ge.s32.totalorder %v290, %v638
          %vm644 = vcmp.ge.s32.totalorder %v291, %v638
          %vm645 = vcmp.ge.s32.totalorder %v292, %v638
          %vm646 = vcmp.ge.s32.totalorder %v293, %v638
          %v647 = vadd.s32 %v272, 8
          %v648 = vlaneseq
          %v649 = vshrl.u32 %v648, 7
          %v650 = vsub.s32 0, %v649
          %v651 = vrot.slane %v647, %v650
          %vm652 = vcmp.lt.s32.totalorder %v286, %v651
          %vm653 = vcmp.lt.s32.totalorder %v287, %v651
          %vm654 = vcmp.lt.s32.totalorder %v288, %v651
          %vm655 = vcmp.lt.s32.totalorder %v289, %v651
          %vm656 = vcmp.lt.s32.totalorder %v290, %v651
          %vm657 = vcmp.lt.s32.totalorder %v291, %v651
          %vm658 = vcmp.lt.s32.totalorder %v292, %v651
          %vm659 = vcmp.lt.s32.totalorder %v293, %v651
          %vm660 = vmand %vm639, %vm652
          %vm661 = vmand %vm640, %vm653
          %vm662 = vmand %vm641, %vm654
          %vm663 = vmand %vm642, %vm655
          %vm664 = vmand %vm643, %vm656
          %vm665 = vmand %vm644, %vm657
          %vm666 = vmand %vm645, %vm658
          %vm667 = vmand %vm646, %vm659
          %v668 = vlaneseq
          %v669 = vshrl.u32 %v668, 7
          %v670 = vsub.s32 0, %v669
          %v671 = vrot.slane %v261, %v670
          %v672 = vsel %vm660, %v671, 0.0
          %v673 = vsel %vm661, %v671, 0.0
          %v674 = vsel %vm662, %v671, 0.0
          %v675 = vsel %vm663, %v671, 0.0
          %v676 = vsel %vm664, %v671, 0.0
          %v677 = vsel %vm665, %v671, 0.0
          %v678 = vsel %vm666, %v671, 0.0
          %v679 = vsel %vm667, %v671, 0.0
          %v680 = vadd.f32 %v627, %v672
          %v681 = vadd.f32 %v628, %v673
          %v682 = vadd.f32 %v629, %v674
          %v683 = vadd.f32 %v630, %v675
          %v684 = vadd.f32 %v631, %v676
          %v685 = vadd.f32 %v632, %v677
          %v686 = vadd.f32 %v633, %v678
          %v687 = vadd.f32 %v634, %v679
          %v688 = vld [vmem:[#allocation2] sm:$0xff]
          %v689 = vld [vmem:[#allocation2 + $0x8] sm:$0xff]
          %v690 = vld [vmem:[#allocation2 + $0x10] sm:$0xff]
          %v691 = vld [vmem:[#allocation2 + $0x18] sm:$0xff]
          %v692 = vld [vmem:[#allocation2 + $0x20] sm:$0xff]
          %v693 = vld [vmem:[#allocation2 + $0x28] sm:$0xff]
          %v694 = vld [vmem:[#allocation2 + $0x30] sm:$0xff]
          %v695 = vld [vmem:[#allocation2 + $0x38] sm:$0xff]
          %v696 = vmul.f32 %v688, %v680
          %v697 = vmul.f32 %v689, %v681
          %v698 = vmul.f32 %v690, %v682
          %v699 = vmul.f32 %v691, %v683
          %v700 = vmul.f32 %v692, %v684
          %v701 = vmul.f32 %v693, %v685
          %v702 = vmul.f32 %v694, %v686
          %v703 = vmul.f32 %v695, %v687
          %v704 = vld [vmem:[%s2] sm:$0xff]
          %v706 = vsel %vm440, %v704, 0
          %708 = vmatprep.subr.mxu0 0.0
          %709 = vmatpush1.msra.mxu0 0.0
          %710 = vmatprep.subr.mxu0 0.0
          %711 = vmatpush1.msra.mxu0 0.0
          %712 = vmatprep.subr.mxu0 0.0
          %713 = vmatpush1.msra.mxu0 0.0
          %714 = vmatprep.subr.mxu0 0.0
          %715 = vmatpush1.msra.mxu0 0.0
          %716 = vmatprep.subr.mxu0 0.0
          %717 = vmatpush1.msra.mxu0 0.0
          %718 = vmatprep.subr.mxu0 0.0
          %719 = vmatpush1.msra.mxu0 0.0
          %720 = vmatprep.subr.mxu0 0.0
          %721 = vmatpush1.msra.mxu0 0.0
          %722 = vmatprep.subr.mxu0 0.0
          %723 = vmatpush1.msra.mxu0 0.0
          %724 = vmatprep.subr.mxu0 0.0
          %725 = vmatpush1.msra.mxu0 %v703
          %726 = vmatprep.subr.mxu0 0.0
          %727 = vmatpush1.msra.mxu0 %v702
          %728 = vmatprep.subr.mxu0 0.0
          %729 = vmatpush1.msra.mxu0 %v701
          %730 = vmatprep.subr.mxu0 0.0
          %731 = vmatpush1.msra.mxu0 %v700
          %732 = vmatprep.subr.mxu0 0.0
          %733 = vmatpush1.msra.mxu0 %v699
          %734 = vmatprep.subr.mxu0 0.0
          %735 = vmatpush1.msra.mxu0 %v698
          %736 = vmatprep.subr.mxu0 0.0
          %737 = vmatpush1.msra.mxu0 %v697
          %738 = vmatprep.subr.mxu0 0.0
          %739 = vmatpush1.msra.mxu0 %v696
          %740 = vmatprep.subr.mxu0 0.0
          %741 = vmatpush2.msra.mxu0 0.0
          %742 = vmatprep.subr.mxu0 0.0
          %743 = vmatpush2.msra.mxu0 0.0
          %744 = vmatprep.subr.mxu0 0.0
          %745 = vmatpush2.msra.mxu0 0.0
          %746 = vmatprep.subr.mxu0 0.0
          %747 = vmatpush2.msra.mxu0 0.0
          %748 = vmatprep.subr.mxu0 0.0
          %749 = vmatpush2.msra.mxu0 0.0
          %750 = vmatprep.subr.mxu0 0.0
          %751 = vmatpush2.msra.mxu0 0.0
          %752 = vmatprep.subr.mxu0 0.0
          %753 = vmatpush2.msra.mxu0 0.0
          %754 = vmatprep.subr.mxu0 0.0
          %755 = vmatpush2.msra.mxu0 0.0
          %756 = vmatprep.subr.mxu0 0.0
          %757 = vmatpush2.msra.mxu0 0.0
          %758 = vmatprep.subr.mxu0 0.0
          %759 = vmatpush2.msra.mxu0 0.0
          %760 = vmatprep.subr.mxu0 0.0
          %761 = vmatpush2.msra.mxu0 0.0
          %762 = vmatprep.subr.mxu0 0.0
          %763 = vmatpush2.msra.mxu0 0.0
          %764 = vmatprep.subr.mxu0 0.0
          %765 = vmatpush2.msra.mxu0 0.0
          %766 = vmatprep.subr.mxu0 0.0
          %767 = vmatpush2.msra.mxu0 0.0
          %768 = vmatprep.subr.mxu0 0.0
          %769 = vmatpush2.msra.mxu0 0.0
          %770 = vmatprep.subr.mxu0 0.0
          %771 = vmatpush2.msra.mxu0 0.0
          %772 = vmatprep.mubr.f32.mxu0 0.0
          %773 = vmatmul.mubr.f32.gmra.mxu0 %v706
          %v774 = vpop.f32.mrf.mxu0
          %v775 = vadd.f32 0.0, %v774
          %v776 = vpop.f32.mrf.mxu0
          %777 = vdwg.mxu0
          %778 = vst.msk [vmem:[%s233] sm:$0xff] %vm578, %v775
        $region44: #{tpu_custom_call.1} parent=31 // pred_fallthru
          _
        %s779 = sand.u32 %s126, 1
        %s780 = scalar_lea.sflag [#allocation5], %s779
        %s781 = sand.u32 %s126, 1
        %s782 = smul.addr %s781, 8
        %s783 = scalar_lea.vmem [#allocation6], %s782
        // Predicated region
        $region45: #{tpu_custom_call.1} parent=31 // pred_check
          %p784 = pneg %p136
        $region46: #{tpu_custom_call.1} parent=31 // pred_check_branch
          %786 = sbr.rel (%p784) target = $region48
        $region47: #{tpu_custom_call.1} parent=31 // pred_region
          %s788 = ssub.s32 128, 128
          %789 = vsyncadd %s780, %s788
          %s790 = sadd.s32 %s26, %s25
          %s791 = smul.addr %s790, 128
          %s792 = scalar_lea.hbm %s3, %s791
          %s794 = sshll.u32 %s783, 4
          %s795 = int_to_ptr.vmem [resolvable:$true] %s794
          %797 = dma.vmem_to_hbm [thread:$0]  %s795, 128, %s792, %s780
        $region48: #{tpu_custom_call.1} parent=31 // pred_fallthru
          _
      $region32: #{tpu_custom_call.1} parent=5 // pred_fallthru
        _
      %p798 = scmp.le.s32.totalorder 2, %s15
      // Predicated region
      $region49: #{tpu_custom_call.1} parent=5 // pred_check
        %p799 = pneg %p798
      $region50: #{tpu_custom_call.1} parent=5 // pred_check_branch
        %801 = sbr.rel (%p799) target = $region52
      $region51: #{tpu_custom_call.1} parent=5 // pred_region
        %s802 = ssub.s32 %s15, 2
        // Predicated region
        $region53: #{tpu_custom_call.1} parent=51 // pred_check
          %p803 = pneg %p142
        $region54: #{tpu_custom_call.1} parent=51 // pred_check_branch
          %805 = sbr.rel (%p803) target = $region56
        $region55: #{tpu_custom_call.1} parent=51 // pred_region
          %s806 = sand.u32 %s127, 1
          %s807 = scalar_lea.sflag [#allocation5], %s806
          %s808 = sand.u32 %s127, 1
          %s809 = smul.addr %s808, 8
          %s810 = scalar_lea.vmem [#allocation6], %s809
          %811 = dma.done %s807, 128
        $region56: #{tpu_custom_call.1} parent=51 // pred_fallthru
          _
      $region52: #{tpu_custom_call.1} parent=5 // pred_fallthru
        _
    $region6: #{tpu_custom_call.1} parent=1 // loop_footer
      %s19 = sadd.s32 1, %s15
    $region7: #{tpu_custom_call.1} parent=1 // loop_footer_branch
      %14 = sbr.rel target = $region3
    $region8: #{tpu_custom_call.1} parent=1 // loop_exit
      _
    %812 = vsyncpa [#allocation4], 1
    %s813 = scalar_lea.sflag [#allocation4], 1
    %814 = vsyncpa %s813, 1
    %815 = vsyncpa [#allocation5], 1
    %s816 = scalar_lea.sflag [#allocation5], 1
    %817 = vsyncpa %s816, 1

</llo_original>
